<compile_context>
chip_gen: v7x
topology: tpu7x:2x2x1
jax: 0.10.0
libtpu: 0.0.40
codegen_flags: <defaults>
</compile_context>

<pallas_src>
import jax
import jax.numpy as jnp
from jax.experimental import pallas as pl
from jax.experimental.pallas import tpu as pltpu


def att2_kernel(v_ref, q_ref, wvt_ref, bv_ref, wqt_ref, bq_ref, wl_ref, bl_ref, o_ref):
    TB, K, Vd = v_ref.shape
    H = wvt_ref.shape[1]

    # q projection for the whole batch tile: one well-shaped (TB, Qd)@(Qd, H) MXU matmul.
    qp = jnp.dot(q_ref[...], wqt_ref[...], preferred_element_type=jnp.float32) + bq_ref[...]
    qp = jnp.maximum(qp, 0.0)                                # (TB, H)
    # Fold the final (H -> 1) weight-norm linear into the q side:
    #   logits = (vp * qp) @ Wl^T  ==  sum_H vp * (qp * Wl)
    scaled = qp * wl_ref[...]                                # (TB, H)

    # v projection: one (TB*K, Vd)@(Vd, H) matmul for every row in the tile.
    # K == 8 keeps the reshape sublane-tile aligned (no relayout copy).
    v2 = v_ref[...].reshape(TB * K, Vd)
    vp = jnp.dot(v2, wvt_ref[...], preferred_element_type=jnp.float32) + bv_ref[...]
    vp = jnp.maximum(vp, 0.0)                                # (TB*K, H)
    vp = vp.reshape(TB, K, H)

    # logits[b, k] = sum_h vp[b, k, h] * scaled[b, h] + bl   (VPU mul + lane reduce, MXU idle)
    logits = jnp.sum(vp * scaled[:, None, :], axis=-1) + bl_ref[0]   # (TB, K)

    # softmax over K (dim=1 of the module's [batch, k, 1] logits)
    m = jnp.max(logits, axis=-1, keepdims=True)
    e = jnp.exp(logits - m)
    w = e * pl.reciprocal(jnp.sum(e, axis=-1, keepdims=True), approx=False)
    o_ref[...] = w.astype(o_ref.dtype)                       # lane-dense (TB, K) store


def att_2_forward(v, q, wv, bv, wq, bq, wl, bl):
    B, K, Vd = v.shape
    _, Qd = q.shape
    H = wv.shape[0]

    # Batch tile: aim for >= 256 rows (TB*K) per MXU pass, capped at B; keep it a divisor of B.
    TB = min(B, max(1, -(-256 // K)))
    while B % TB != 0:
        TB -= 1

    # Host-side layout plumbing (free): pre-transpose effective weights, reshape biases.
    wv_t = wv.T                       # (Vd, H)
    wq_t = wq.T                       # (Qd, H)
    wl2 = wl.reshape(1, H)            # (1, H)  (module's Wl is (1, q_dim); num_hid == q_dim)
    bv2 = bv.reshape(1, H)
    bq2 = bq.reshape(1, H)
    bl1 = bl.reshape(1,)              # scalar -> SMEM

    out = pl.pallas_call(
        att2_kernel,
        out_shape=jax.ShapeDtypeStruct((B, K), jnp.float32),
        grid=(B // TB,),
        in_specs=[
            pl.BlockSpec((TB, K, Vd), lambda i: (i, 0, 0)),     # v tile
            pl.BlockSpec((TB, Qd), lambda i: (i, 0)),           # q tile
            pl.BlockSpec((Vd, H), lambda i: (0, 0)),            # Wv^T (effective, pre-transposed)
            pl.BlockSpec((1, H), lambda i: (0, 0)),             # bv
            pl.BlockSpec((Qd, H), lambda i: (0, 0)),            # Wq^T (effective, pre-transposed)
            pl.BlockSpec((1, H), lambda i: (0, 0)),             # bq
            pl.BlockSpec((1, H), lambda i: (0, 0)),             # Wl (effective)
            pl.BlockSpec(memory_space=pltpu.MemorySpace.SMEM),  # bl scalar in SMEM
        ],
        out_specs=pl.BlockSpec((TB, K), lambda i: (i, 0)),      # lane-dense output slab
        compiler_params=pltpu.CompilerParams(
            dimension_semantics=("parallel",),
        ),
    )(v, q, wv_t, bv2, wq_t, bq2, wl2, bl1)

    # Back to the module's [batch, k, 1] layout (wrapper-side reshape is free).
    return out[..., None]


def weight_norm_effective(v_weight, g_scalar):
    # PyTorch weight_norm(dim=None): W = g * V / ||V||_F  (g is a scalar)
    return g_scalar * v_weight / jnp.sqrt(jnp.sum(v_weight * v_weight))


def make_params(key, v_dim, q_dim, num_hid):
    ks = jax.random.split(key, 8)
    wv_v = jax.random.normal(ks[0], (num_hid, v_dim), jnp.float32) * 0.1
    gv = jnp.float32(1.3)
    bv = jax.random.normal(ks[1], (num_hid,), jnp.float32) * 0.1

    wq_v = jax.random.normal(ks[2], (num_hid, q_dim), jnp.float32) * 0.1
    gq = jnp.float32(0.9)
    bq = jax.random.normal(ks[3], (num_hid,), jnp.float32) * 0.1

    wl_v = jax.random.normal(ks[4], (1, q_dim), jnp.float32) * 0.1
    gl = jnp.float32(1.1)
    bl = jax.random.normal(ks[5], (1,), jnp.float32) * 0.1

    wv = weight_norm_effective(wv_v, gv)
    wq = weight_norm_effective(wq_v, gq)
    wl = weight_norm_effective(wl_v, gl)
    return wv, bv, wq, bq, wl, bl


def reference(v, q, wv, bv, wq, bq, wl, bl):
    vp = jnp.maximum(jnp.einsum('bkd,hd->bkh', v, wv) + bv, 0.0)
    qp = jnp.maximum(q @ wq.T + bq, 0.0)
    joint = vp * qp[:, None, :]
    logits = jnp.einsum('bkh,oh->bko', joint, wl) + bl
    return jax.nn.softmax(logits, axis=1)


if __name__ == "__main__":
    key = jax.random.PRNGKey(0)
    k_v, k_q, k_p = jax.random.split(key, 3)

    batch, k, v_dim = 2, 8, 32
    q_dim = 32
    num_hid = 32  # must equal q_dim for the original module's final linear (inherited constraint)

    v = jax.random.normal(k_v, (batch, k, v_dim), jnp.float32)
    q = jax.random.normal(k_q, (batch, q_dim), jnp.float32)
    wv, bv, wq, bq, wl, bl = make_params(k_p, v_dim, q_dim, num_hid)

    out = att_2_forward(v, q, wv, bv, wq, bq, wl, bl)
    out = jax.block_until_ready(out)

    ref = reference(v, q, wv, bv, wq, bq, wl, bl)
    assert out.shape == (batch, k, 1)
    assert jnp.allclose(out, ref, atol=1e-5, rtol=1e-5), "mismatch vs JAX reference"

    print("KERNEL_OK")
</pallas_src>

<mosaic_0001>
module attributes {stable_mosaic.version = 11 : i64} {
  func.func @att2_kernel(%arg0: i32, %arg1: memref<2x8x32xf32, #tpu.memory_space<vmem>>, %arg2: memref<2x32xf32, #tpu.memory_space<vmem>>, %arg3: memref<32x32xf32, #tpu.memory_space<vmem>>, %arg4: memref<1x32xf32, #tpu.memory_space<vmem>>, %arg5: memref<32x32xf32, #tpu.memory_space<vmem>>, %arg6: memref<1x32xf32, #tpu.memory_space<vmem>>, %arg7: memref<1x32xf32, #tpu.memory_space<vmem>>, %arg8: memref<1xf32, #tpu.memory_space<smem>>, %arg9: memref<2x8xf32, #tpu.memory_space<vmem>>) attributes {dimension_semantics = [#tpu.dimension_semantics<parallel>], iteration_bounds = array<i64: 1>, scalar_prefetch = 0 : i64, scratch_operands = 0 : i64, tpu.core_type = #tpu.core_type<tc>, window_params = [{transform_indices = @transform_0, window_bounds = array<i64: 2, 8, 32>}, {transform_indices = @transform_1, window_bounds = array<i64: 2, 32>}, {pipeline_mode = #tpu.pipeline_mode<synchronous>, transform_indices = @transform_2, window_bounds = array<i64: 32, 32>}, {pipeline_mode = #tpu.pipeline_mode<synchronous>, transform_indices = @transform_3, window_bounds = array<i64: 1, 32>}, {pipeline_mode = #tpu.pipeline_mode<synchronous>, transform_indices = @transform_4, window_bounds = array<i64: 32, 32>}, {pipeline_mode = #tpu.pipeline_mode<synchronous>, transform_indices = @transform_5, window_bounds = array<i64: 1, 32>}, {pipeline_mode = #tpu.pipeline_mode<synchronous>, transform_indices = @transform_6, window_bounds = array<i64: 1, 32>}, {transform_indices = @transform_7, window_bounds = array<i64: 1>}, {transform_indices = @transform_8, window_bounds = array<i64: 2, 8>}]} {
    %c0 = arith.constant 0 : index
    %c0_0 = arith.constant 0 : index
    %0 = vector.load %arg2[%c0, %c0_0] : memref<2x32xf32, #tpu.memory_space<vmem>>, vector<2x32xf32>
    %c0_1 = arith.constant 0 : index
    %c0_2 = arith.constant 0 : index
    %1 = vector.load %arg5[%c0_1, %c0_2] : memref<32x32xf32, #tpu.memory_space<vmem>>, vector<32x32xf32>
    %cst = arith.constant dense<0.000000e+00> : vector<2x32xf32>
    %2 = tpu.matmul %0, %1, %cst {dimension_numbers = #tpu.dot_dimension_numbers<[1], [0], [0], [1], [0, 0, 1, 1], [], []>} : vector<2x32xf32>, vector<32x32xf32>, vector<2x32xf32> -> vector<2x32xf32>
    %c0_3 = arith.constant 0 : index
    %c0_4 = arith.constant 0 : index
    %3 = vector.load %arg6[%c0_3, %c0_4] : memref<1x32xf32, #tpu.memory_space<vmem>>, vector<1x32xf32>
    %4 = vector.broadcast %3 : vector<1x32xf32> to vector<2x32xf32>
    %5 = arith.addf %2, %4 : vector<2x32xf32>
    %cst_5 = arith.constant 0.000000e+00 : f32
    %6 = vector.broadcast %cst_5 : f32 to vector<2x32xf32>
    %7 = arith.maximumf %5, %6 : vector<2x32xf32>
    %c0_6 = arith.constant 0 : index
    %c0_7 = arith.constant 0 : index
    %8 = vector.load %arg7[%c0_6, %c0_7] : memref<1x32xf32, #tpu.memory_space<vmem>>, vector<1x32xf32>
    %9 = vector.broadcast %8 : vector<1x32xf32> to vector<2x32xf32>
    %10 = arith.mulf %7, %9 : vector<2x32xf32>
    %c0_8 = arith.constant 0 : index
    %c0_9 = arith.constant 0 : index
    %c0_10 = arith.constant 0 : index
    %11 = vector.load %arg1[%c0_8, %c0_9, %c0_10] : memref<2x8x32xf32, #tpu.memory_space<vmem>>, vector<2x8x32xf32>
    %12 = vector.shape_cast %11 : vector<2x8x32xf32> to vector<16x32xf32>
    %c0_11 = arith.constant 0 : index
    %c0_12 = arith.constant 0 : index
    %13 = vector.load %arg3[%c0_11, %c0_12] : memref<32x32xf32, #tpu.memory_space<vmem>>, vector<32x32xf32>
    %cst_13 = arith.constant dense<0.000000e+00> : vector<16x32xf32>
    %14 = tpu.matmul %12, %13, %cst_13 {dimension_numbers = #tpu.dot_dimension_numbers<[1], [0], [0], [1], [0, 0, 1, 1], [], []>} : vector<16x32xf32>, vector<32x32xf32>, vector<16x32xf32> -> vector<16x32xf32>
    %c0_14 = arith.constant 0 : index
    %c0_15 = arith.constant 0 : index
    %15 = vector.load %arg4[%c0_14, %c0_15] : memref<1x32xf32, #tpu.memory_space<vmem>>, vector<1x32xf32>
    %16 = vector.broadcast %15 : vector<1x32xf32> to vector<16x32xf32>
    %17 = arith.addf %14, %16 : vector<16x32xf32>
    %cst_16 = arith.constant 0.000000e+00 : f32
    %18 = vector.broadcast %cst_16 : f32 to vector<16x32xf32>
    %19 = arith.maximumf %17, %18 : vector<16x32xf32>
    %20 = vector.shape_cast %19 : vector<16x32xf32> to vector<2x8x32xf32>
    %21 = vector.shape_cast %10 : vector<2x32xf32> to vector<2x1x32xf32>
    %22 = vector.broadcast %21 : vector<2x1x32xf32> to vector<2x8x32xf32>
    %23 = arith.mulf %20, %22 : vector<2x8x32xf32>
    %cst_17 = arith.constant dense<0.000000e+00> : vector<2x8xf32>
    %24 = vector.multi_reduction <add>, %23, %cst_17 [2] : vector<2x8x32xf32> to vector<2x8xf32>
    %c0_18 = arith.constant 0 : index
    %25 = memref.load %arg8[%c0_18] : memref<1xf32, #tpu.memory_space<smem>>
    %26 = vector.broadcast %25 : f32 to vector<2x8xf32>
    %27 = arith.addf %24, %26 : vector<2x8xf32>
    %cst_19 = arith.constant dense<0xFF800000> : vector<2xf32>
    %28 = vector.multi_reduction <maximumf>, %27, %cst_19 [1] : vector<2x8xf32> to vector<2xf32>
    %29 = vector.shape_cast %28 : vector<2xf32> to vector<2x1xf32>
    %30 = vector.broadcast %29 : vector<2x1xf32> to vector<2x8xf32>
    %31 = arith.subf %27, %30 : vector<2x8xf32>
    %32 = math.exp %31 : vector<2x8xf32>
    %cst_20 = arith.constant dense<0.000000e+00> : vector<2xf32>
    %33 = vector.multi_reduction <add>, %32, %cst_20 [1] : vector<2x8xf32> to vector<2xf32>
    %34 = vector.shape_cast %33 : vector<2xf32> to vector<2x1xf32>
    %35 = tpu.reciprocal %34 : vector<2x1xf32> -> vector<2x1xf32>
    %36 = vector.broadcast %35 : vector<2x1xf32> to vector<2x8xf32>
    %37 = arith.mulf %32, %36 : vector<2x8xf32>
    %c0_21 = arith.constant 0 : index
    %c0_22 = arith.constant 0 : index
    %38 = vector.load %arg9[%c0_21, %c0_22] : memref<2x8xf32, #tpu.memory_space<vmem>>, vector<2x8xf32>
    tpu.vector_store %arg9[%c0_21, %c0_22], %37 {strides = array<i32>} : memref<2x8xf32, #tpu.memory_space<vmem>>, vector<2x8xf32>,
    return
  }
  func.func @transform_0(%arg0: i32) -> (i32, i32, i32) {
    %c0_i32 = arith.constant 0 : i32
    %c0_i32_0 = arith.constant 0 : i32
    %c0_i32_1 = arith.constant 0 : i32
    return %arg0, %c0_i32, %c0_i32_0 : i32, i32, i32
  }
  func.func @transform_1(%arg0: i32) -> (i32, i32) {
    %c0_i32 = arith.constant 0 : i32
    %c0_i32_0 = arith.constant 0 : i32
    return %arg0, %c0_i32 : i32, i32
  }
  func.func @transform_2(%arg0: i32) -> (i32, i32) {
    %c0_i32 = arith.constant 0 : i32
    %c0_i32_0 = arith.constant 0 : i32
    %c0_i32_1 = arith.constant 0 : i32
    return %c0_i32, %c0_i32_0 : i32, i32
  }
  func.func @transform_3(%arg0: i32) -> (i32, i32) {
    %c0_i32 = arith.constant 0 : i32
    %c0_i32_0 = arith.constant 0 : i32
    %c0_i32_1 = arith.constant 0 : i32
    return %c0_i32, %c0_i32_0 : i32, i32
  }
  func.func @transform_4(%arg0: i32) -> (i32, i32) {
    %c0_i32 = arith.constant 0 : i32
    %c0_i32_0 = arith.constant 0 : i32
    %c0_i32_1 = arith.constant 0 : i32
    return %c0_i32, %c0_i32_0 : i32, i32
  }
  func.func @transform_5(%arg0: i32) -> (i32, i32) {
    %c0_i32 = arith.constant 0 : i32
    %c0_i32_0 = arith.constant 0 : i32
    %c0_i32_1 = arith.constant 0 : i32
    return %c0_i32, %c0_i32_0 : i32, i32
  }
  func.func @transform_6(%arg0: i32) -> (i32, i32) {
    %c0_i32 = arith.constant 0 : i32
    %c0_i32_0 = arith.constant 0 : i32
    %c0_i32_1 = arith.constant 0 : i32
    return %c0_i32, %c0_i32_0 : i32, i32
  }
  func.func @transform_7(%arg0: i32) -> i32 {
    %c0_i32 = arith.constant 0 : i32
    %c0_i32_0 = arith.constant 0 : i32
    return %c0_i32 : i32
  }
  func.func @transform_8(%arg0: i32) -> (i32, i32) {
    %c0_i32 = arith.constant 0 : i32
    %c0_i32_0 = arith.constant 0 : i32
    return %arg0, %c0_i32 : i32, i32
  }
}

</mosaic_0001>

<llo_original>
// kernel: tpu_custom_call.1
$region0: #{tpu_custom_call.1}
  #allocation0 [shape = 'u32[]', space=smem, size = 0x4, offset = 0x4, fixed_abs, tag = 'smem constant byte address 0x4 - core index']
  #allocation1 [shape = 'u32[144,128]{1,0:T(1,128)}', space=vmem, size = 0x12000, scoped, tag = 'internal scratch']
  #allocation2 [shape = 'f32[1]{0:T(128)S(6)}', space=smem, size = 0x200, scoped, tag = 'scoped memory for tpu_custom_call.1']
  %s0 = inlined_call_operand.hbm [shape: f32[2,8,32], index: 0, kind: input, shape index: {}]
  %s1 = inlined_call_operand.vmem [shape: f32[2,32], index: 1, kind: input, shape index: {}]
  %s2 = inlined_call_operand.hbm [shape: f32[32,32], index: 2, kind: input, shape index: {}]
  %s3 = inlined_call_operand.vmem [shape: f32[1,32], index: 3, kind: input, shape index: {}]
  %s4 = inlined_call_operand.hbm [shape: f32[32,32], index: 4, kind: input, shape index: {}]
  %s5 = inlined_call_operand.vmem [shape: f32[1,32], index: 5, kind: input, shape index: {}]
  %s6 = inlined_call_operand.vmem [shape: f32[1,32], index: 6, kind: input, shape index: {}]
  %s7 = inlined_call_operand.<no memory space> [shape: f32[1], index: 7, kind: input, shape index: {}]
  %s8 = inlined_call_operand.hbm [shape: f32[2,8], index: 8, kind: output, shape index: {}]
  %s9 = sld [smem:[#allocation0]]
  $region54: #{tpu_custom_call.1} parent=0
    _
  %s11 = ssub.s32 1, %s9
  %s12 = scalar_select 0, %s11, %s9
  %13 = sst [smem:[#allocation2]] %s7
  $region1: #{tpu_custom_call.1} parent=0
    #allocation3 [shape = 'u8[8192]{0}', space=vmem, size = 0x2000, scoped, tag = 'input window, operand 0, single buffered']
    #allocation4 [shape = 's32[1]{0}', space=sflag, size = 0x4, scoped, tag = 'scoped memory for tpu_custom_call.1']
    #allocation5 [shape = 's32[1]{0}', space=sflag, size = 0x4, scoped, tag = 'scoped memory for tpu_custom_call.1']
    #allocation6 [shape = 'u8[16384]{0}', space=vmem, size = 0x4000, scoped, tag = 'input window, operand 2, single buffered']
    #allocation7 [shape = 's32[1]{0}', space=sflag, size = 0x4, scoped, tag = 'scoped memory for tpu_custom_call.1']
    #allocation8 [shape = 'u8[16384]{0}', space=vmem, size = 0x4000, scoped, tag = 'input window, operand 4, single buffered']
    #allocation9 [shape = 'u8[1024]{0}', space=vmem, size = 0x400, scoped, tag = 'output window, operand 0, single buffered']
    %14 = vsyncpa [#allocation4], 0
    %15 = vsyncpa [#allocation7], 0
    %16 = vsyncpa [#allocation5], 0
    // Predicated region
    $region2: #{tpu_custom_call.1} parent=1 // pred_check
      _
    $region3: #{tpu_custom_call.1} parent=1 // pred_check_branch
      %18 = sbr.rel (0) target = $region5
    $region4: #{tpu_custom_call.1} parent=1 // pred_region
      %s20 = ssub.s32 256, 256
      %21 = vsyncadd [#allocation4], %s20
      %s22 = sshll.u32 [#allocation3], 4
      %s23 = int_to_ptr.vmem [resolvable:$true] %s22
      %28 = dma.hbm_to_vmem [thread:$0]  %s0, 256, %s23, [#allocation4], 128, 128, 8
    $region5: #{tpu_custom_call.1} parent=1 // pred_fallthru
      _
    // Predicated region
    $region6: #{tpu_custom_call.1} parent=1 // pred_check
      _
    $region7: #{tpu_custom_call.1} parent=1 // pred_check_branch
      %30 = sbr.rel (0) target = $region9
    $region8: #{tpu_custom_call.1} parent=1 // pred_region
      _
    $region9: #{tpu_custom_call.1} parent=1 // pred_fallthru
      _
    // Predicated region
    $region10: #{tpu_custom_call.1} parent=1 // pred_check
      _
    $region11: #{tpu_custom_call.1} parent=1 // pred_check_branch
      %32 = sbr.rel (0) target = $region13
    $region12: #{tpu_custom_call.1} parent=1 // pred_region
      %s34 = ssub.s32 512, 512
      %35 = vsyncadd [#allocation7], %s34
      %s36 = sshll.u32 [#allocation6], 4
      %s37 = int_to_ptr.vmem [resolvable:$true] %s36
      %42 = dma.hbm_to_vmem [thread:$0]  %s2, 512, %s37, [#allocation7], 128, 128, 8
    $region13: #{tpu_custom_call.1} parent=1 // pred_fallthru
      _
    // Predicated region
    $region14: #{tpu_custom_call.1} parent=1 // pred_check
      _
    $region15: #{tpu_custom_call.1} parent=1 // pred_check_branch
      %44 = sbr.rel (0) target = $region17
    $region16: #{tpu_custom_call.1} parent=1 // pred_region
      _
    $region17: #{tpu_custom_call.1} parent=1 // pred_fallthru
      _
    // Predicated region
    $region18: #{tpu_custom_call.1} parent=1 // pred_check
      _
    $region19: #{tpu_custom_call.1} parent=1 // pred_check_branch
      %46 = sbr.rel (0) target = $region21
    $region20: #{tpu_custom_call.1} parent=1 // pred_region
      %s48 = ssub.s32 512, 512
      %49 = vsyncadd [#allocation7], %s48
      %s50 = sshll.u32 [#allocation8], 4
      %s51 = int_to_ptr.vmem [resolvable:$true] %s50
      %56 = dma.hbm_to_vmem [thread:$0]  %s4, 512, %s51, [#allocation7], 128, 128, 8
    $region21: #{tpu_custom_call.1} parent=1 // pred_fallthru
      _
    // Predicated region
    $region22: #{tpu_custom_call.1} parent=1 // pred_check
      _
    $region23: #{tpu_custom_call.1} parent=1 // pred_check_branch
      %58 = sbr.rel (0) target = $region25
    $region24: #{tpu_custom_call.1} parent=1 // pred_region
      _
    $region25: #{tpu_custom_call.1} parent=1 // pred_fallthru
      _
    // Predicated region
    $region26: #{tpu_custom_call.1} parent=1 // pred_check
      _
    $region27: #{tpu_custom_call.1} parent=1 // pred_check_branch
      %60 = sbr.rel (0) target = $region29
    $region28: #{tpu_custom_call.1} parent=1 // pred_region
      _
    $region29: #{tpu_custom_call.1} parent=1 // pred_fallthru
      _
    // Predicated region
    $region30: #{tpu_custom_call.1} parent=1 // pred_check
      _
    $region31: #{tpu_custom_call.1} parent=1 // pred_check_branch
      %62 = sbr.rel (0) target = $region33
    $region32: #{tpu_custom_call.1} parent=1 // pred_region
      _
    $region33: #{tpu_custom_call.1} parent=1 // pred_fallthru
      _
    // Predicated region
    $region34: #{tpu_custom_call.1} parent=1 // pred_check
      _
    $region35: #{tpu_custom_call.1} parent=1 // pred_check_branch
      %64 = sbr.rel (0) target = $region37
    $region36: #{tpu_custom_call.1} parent=1 // pred_region
      %65 = dma.done [#allocation4], 256
    $region37: #{tpu_custom_call.1} parent=1 // pred_fallthru
      _
    // Predicated region
    $region38: #{tpu_custom_call.1} parent=1 // pred_check
      _
    $region39: #{tpu_custom_call.1} parent=1 // pred_check_branch
      %67 = sbr.rel (0) target = $region41
    $region40: #{tpu_custom_call.1} parent=1 // pred_region
      %68 = dma.done [#allocation7], 512
    $region41: #{tpu_custom_call.1} parent=1 // pred_fallthru
      _
    // Predicated region
    $region42: #{tpu_custom_call.1} parent=1 // pred_check
      _
    $region43: #{tpu_custom_call.1} parent=1 // pred_check_branch
      %70 = sbr.rel (0) target = $region45
    $region44: #{tpu_custom_call.1} parent=1 // pred_region
      %71 = dma.done [#allocation7], 512
    $region45: #{tpu_custom_call.1} parent=1 // pred_fallthru
      _
    %v72 = vld [vmem:[%s1] sm:$0x3]
    %v73 = vld [vmem:[#allocation8] sm:$0xff]
    %v74 = vld [vmem:[#allocation8 + $0x8] sm:$0xff]
    %v75 = vld [vmem:[#allocation8 + $0x10] sm:$0xff]
    %v76 = vld [vmem:[#allocation8 + $0x18] sm:$0xff]
    %v77 = vld [vmem:[%s5] sm:$0x1]
    %v79 = vlaneseq
    %v80 = vshrl.u32 %v79, 7
    %v81 = vsub.s32 0, %v80
    %v82 = vrot.slane %v77, %v81
    %vm84 = vcmask 261120
    %v86 = vsel %vm84, %v72, 0
    %88 = vmatprep.subr.mxu0 0.0
    %89 = vmatpush1.msra.mxu0 %v73
    %90 = vmatprep.subr.mxu0 0.0
    %91 = vmatpush1.msra.mxu0 %v74
    %92 = vmatprep.subr.mxu0 0.0
    %93 = vmatpush1.msra.mxu0 %v75
    %94 = vmatprep.subr.mxu0 0.0
    %95 = vmatpush1.msra.mxu0 %v76
    %96 = vmatprep.subr.mxu0 0.0
    %97 = vmatpush1.msra.mxu0 0.0
    %98 = vmatprep.subr.mxu0 0.0
    %99 = vmatpush1.msra.mxu0 0.0
    %100 = vmatprep.subr.mxu0 0.0
    %101 = vmatpush1.msra.mxu0 0.0
    %102 = vmatprep.subr.mxu0 0.0
    %103 = vmatpush1.msra.mxu0 0.0
    %104 = vmatprep.subr.mxu0 0.0
    %105 = vmatpush1.msra.mxu0 0.0
    %106 = vmatprep.subr.mxu0 0.0
    %107 = vmatpush1.msra.mxu0 0.0
    %108 = vmatprep.subr.mxu0 0.0
    %109 = vmatpush1.msra.mxu0 0.0
    %110 = vmatprep.subr.mxu0 0.0
    %111 = vmatpush1.msra.mxu0 0.0
    %112 = vmatprep.subr.mxu0 0.0
    %113 = vmatpush1.msra.mxu0 0.0
    %114 = vmatprep.subr.mxu0 0.0
    %115 = vmatpush1.msra.mxu0 0.0
    %116 = vmatprep.subr.mxu0 0.0
    %117 = vmatpush1.msra.mxu0 0.0
    %118 = vmatprep.subr.mxu0 0.0
    %119 = vmatpush1.msra.mxu0 0.0
    %120 = vmatprep.subr.mxu0 0.0
    %121 = vmatpush1.msra.mxu0 0.0
    %122 = vmatprep.subr.mxu0 0.0
    %123 = vmatpush1.msra.mxu0 0.0
    %124 = vmatprep.subr.mxu0 0.0
    %125 = vmatpush1.msra.mxu0 0.0
    %126 = vmatprep.subr.mxu0 0.0
    %127 = vmatpush1.msra.mxu0 0.0
    %128 = vmatprep.subr.mxu0 0.0
    %129 = vmatpush1.msra.mxu0 0.0
    %130 = vmatprep.subr.mxu0 0.0
    %131 = vmatpush1.msra.mxu0 0.0
    %132 = vmatprep.subr.mxu0 0.0
    %133 = vmatpush1.msra.mxu0 0.0
    %134 = vmatprep.subr.mxu0 0.0
    %135 = vmatpush1.msra.mxu0 0.0
    %136 = vmatprep.subr.mxu0 0.0
    %137 = vmatpush1.msra.mxu0 0.0
    %138 = vmatprep.subr.mxu0 0.0
    %139 = vmatpush1.msra.mxu0 0.0
    %140 = vmatprep.subr.mxu0 0.0
    %141 = vmatpush1.msra.mxu0 0.0
    %142 = vmatprep.subr.mxu0 0.0
    %143 = vmatpush1.msra.mxu0 0.0
    %144 = vmatprep.subr.mxu0 0.0
    %145 = vmatpush1.msra.mxu0 0.0
    %146 = vmatprep.subr.mxu0 0.0
    %147 = vmatpush1.msra.mxu0 0.0
    %148 = vmatprep.subr.mxu0 0.0
    %149 = vmatpush1.msra.mxu0 0.0
    %150 = vmatprep.subr.mxu0 0.0
    %151 = vmatpush1.msra.mxu0 0.0
    %152 = vmatprep.mubr.f32.mxu0 0.0
    %153 = vmatmul.mubr.f32.gmra.mrb[0].mxu0 %v86
    %v154 = vpop.f32.mrb[0].mxu0
    %v155 = vadd.f32 %v82, %v154
    %v156 = vpop.f32.mrb[0].mxu0
    %157 = vdwg.mxu0
    %v158 = vmax.f32 %v155, 0.0
    %v159 = vld [vmem:[%s6] sm:$0x1]
    %v161 = vlaneseq
    %v162 = vshrl.u32 %v161, 7
    %v163 = vsub.s32 0, %v162
    %v164 = vrot.slane %v159, %v163
    %v166 = vmul.f32 %v158, %v164
    %v167 = vld [vmem:[#allocation3] sm:$0xff]
    %v168 = vld [vmem:[#allocation3 + $0x8] sm:$0xff]
    %v169 = vld [vmem:[#allocation6] sm:$0xff]
    %v170 = vld [vmem:[#allocation6 + $0x8] sm:$0xff]
    %v171 = vld [vmem:[#allocation6 + $0x10] sm:$0xff]
    %v172 = vld [vmem:[#allocation6 + $0x18] sm:$0xff]
    %v173 = vld [vmem:[%s3] sm:$0x1]
    %v175 = vlaneseq
    %v176 = vshrl.u32 %v175, 7
    %v177 = vsub.s32 0, %v176
    %v178 = vrot.slane %v173, %v177
    %v181 = vsel %vm84, %v167, 0
    %v184 = vsel %vm84, %v168, 0
    %186 = vmatprep.subr.mxu0 0.0
    %187 = vmatpush1.msra.mxu0 %v169
    %188 = vmatprep.subr.mxu0 0.0
    %189 = vmatpush1.msra.mxu0 %v170
    %190 = vmatprep.subr.mxu0 0.0
    %191 = vmatpush1.msra.mxu0 %v171
    %192 = vmatprep.subr.mxu0 0.0
    %193 = vmatpush1.msra.mxu0 %v172
    %194 = vmatprep.subr.mxu0 0.0
    %195 = vmatpush1.msra.mxu0 0.0
    %196 = vmatprep.subr.mxu0 0.0
    %197 = vmatpush1.msra.mxu0 0.0
    %198 = vmatprep.subr.mxu0 0.0
    %199 = vmatpush1.msra.mxu0 0.0
    %200 = vmatprep.subr.mxu0 0.0
    %201 = vmatpush1.msra.mxu0 0.0
    %202 = vmatprep.subr.mxu0 0.0
    %203 = vmatpush1.msra.mxu0 0.0
    %204 = vmatprep.subr.mxu0 0.0
    %205 = vmatpush1.msra.mxu0 0.0
    %206 = vmatprep.subr.mxu0 0.0
    %207 = vmatpush1.msra.mxu0 0.0
    %208 = vmatprep.subr.mxu0 0.0
    %209 = vmatpush1.msra.mxu0 0.0
    %210 = vmatprep.subr.mxu0 0.0
    %211 = vmatpush1.msra.mxu0 0.0
    %212 = vmatprep.subr.mxu0 0.0
    %213 = vmatpush1.msra.mxu0 0.0
    %214 = vmatprep.subr.mxu0 0.0
    %215 = vmatpush1.msra.mxu0 0.0
    %216 = vmatprep.subr.mxu0 0.0
    %217 = vmatpush1.msra.mxu0 0.0
    %218 = vmatprep.subr.mxu0 0.0
    %219 = vmatpush1.msra.mxu0 0.0
    %220 = vmatprep.subr.mxu0 0.0
    %221 = vmatpush1.msra.mxu0 0.0
    %222 = vmatprep.subr.mxu0 0.0
    %223 = vmatpush1.msra.mxu0 0.0
    %224 = vmatprep.subr.mxu0 0.0
    %225 = vmatpush1.msra.mxu0 0.0
    %226 = vmatprep.subr.mxu0 0.0
    %227 = vmatpush1.msra.mxu0 0.0
    %228 = vmatprep.subr.mxu0 0.0
    %229 = vmatpush1.msra.mxu0 0.0
    %230 = vmatprep.subr.mxu0 0.0
    %231 = vmatpush1.msra.mxu0 0.0
    %232 = vmatprep.subr.mxu0 0.0
    %233 = vmatpush1.msra.mxu0 0.0
    %234 = vmatprep.subr.mxu0 0.0
    %235 = vmatpush1.msra.mxu0 0.0
    %236 = vmatprep.subr.mxu0 0.0
    %237 = vmatpush1.msra.mxu0 0.0
    %238 = vmatprep.subr.mxu0 0.0
    %239 = vmatpush1.msra.mxu0 0.0
    %240 = vmatprep.subr.mxu0 0.0
    %241 = vmatpush1.msra.mxu0 0.0
    %242 = vmatprep.subr.mxu0 0.0
    %243 = vmatpush1.msra.mxu0 0.0
    %244 = vmatprep.subr.mxu0 0.0
    %245 = vmatpush1.msra.mxu0 0.0
    %246 = vmatprep.subr.mxu0 0.0
    %247 = vmatpush1.msra.mxu0 0.0
    %248 = vmatprep.subr.mxu0 0.0
    %249 = vmatpush1.msra.mxu0 0.0
    %250 = vmatprep.mubr.f32.mxu0 0.0
    %251 = vmatmul.mubr.f32.gmra.mrb[0].mxu0 %v181
    %v252 = vpop.f32.mrb[0].mxu0
    %v253 = vadd.f32 %v178, %v252
    %v254 = vpop.f32.mrb[0].mxu0
    %255 = vmatprep.mubr.f32.mxu0 0.0
    %256 = vmatmul.mubr.f32.gmra.mrb[0].mxu0 %v184
    %v257 = vpop.f32.mrb[0].mxu0
    %v258 = vadd.f32 %v178, %v257
    %v259 = vpop.f32.mrb[0].mxu0
    %260 = vdwg.mxu0
    %v261 = vmax.f32 %v253, 0.0
    %v262 = vmax.f32 %v258, 0.0
    %v265 = vunpack.c.l.s4 1966171168
    %v266 = vunpack.c.0.s8 %v265
    %v267 = vlaneseq
    %v268 = vshrl.u32 %v267, 7
    %v269 = vsub.s32 %v266, %v268
    %v270 = vrot.slane %v166, %v269
    %v271 = vcombine.high %v270, %v270
    %v273 = vunpack.c.l.s4 1966171168
    %v274 = vunpack.c.0.s8 %v273
    %v275 = vlaneseq
    %v276 = vshrl.u32 %v275, 7
    %v277 = vsub.s32 %v274, %v276
    %v278 = vrot.slane %v270, %v277
    %v280 = vunpack.c.l.s4 1966171168
    %v281 = vunpack.c.0.s8 %v280
    %v282 = vlaneseq
    %v283 = vshrl.u32 %v282, 7
    %v284 = vsub.s32 %v281, %v283
    %v285 = vrot.slane %v271, %v284
    %v286 = vlaneseq
    %v287 = vshrl.u32 %v286, 7
    %v288 = vsub.s32 0, %v287
    %v289 = vrot.slane %v278, %v288
    %v290 = vlaneseq
    %v291 = vshrl.u32 %v290, 7
    %v292 = vsub.s32 0, %v291
    %v293 = vrot.slane %v285, %v292
    %v296 = vmul.f32 %v261, %v289
    %v297 = vmul.f32 %v262, %v293
    %v298 = vsel %vm84, %v296, 0.0
    %299 = vadd.xlane.f32.xlu0 %v298
    %v300 = vpop.xlane.xlu0 %299
    %v301 = vsel %vm84, %v297, 0.0
    %302 = vadd.xlane.f32.xlu0 %v301
    %v303 = vpop.xlane.xlu0 %302
    %s304 = sld [smem:[#allocation2]]
    %v305 = vstv %s304
    %v306 = vadd.f32 %v300, %v305
    %v307 = vadd.f32 %v303, %v305
    %v310 = vlaneseq
    %v311 = vand.u32 %v310, 127
    %v312 = vlaneseq
    %v313 = vshrl.u32 %v312, 7
    %v314 = vsub.s32 %v311, %v313
    %v315 = vrot.slane %v306, %v314
    %v316 = vlaneseq
    %v317 = vshrl.u32 %v316, 7
    %v318 = vsub.s32 %v311, %v317
    %v319 = vrot.slane %v307, %v318
    %vm320 = vcmask 1041409
    %v321 = vsel %vm320, %v319, %v315
    %vm323 = vcmask 58368
    %v324 = vsel %vm323, %v321, -inf
    %325 = vmax.xlane.f32.xlu0 %v324
    %v326 = vpop.xlane.xlu0 %325
    %v328 = vlaneseq
    %v329 = vshrl.u32 %v328, 7
    %v330 = vsub.s32 0, %v329
    %v331 = vrot.slane %v326, %v330
    %v332 = vlaneseq
    %v333 = vshrl.u32 %v332, 7
    %v334 = vsub.s32 1, %v333
    %v335 = vrot.slane %v326, %v334
    %v338 = vsub.f32 %v306, %v331
    %v339 = vsub.f32 %v307, %v335
    %v340 = vmul.f32 %v338, 1.442695
    %v341 = vpow.pop %v340
    %v342 = vmul.f32 %v339, 1.442695
    %v343 = vpow.pop %v342
    %346 = vset.pattern.permute.xlu0 0
    %347 = vperm.xlu0 %346, %v341
    %v348 = vpop.permute.xlu0 %347
    %349 = vset.pattern.permute.xlu0 0
    %350 = vperm.xlu0 %349, %v343
    %v351 = vpop.permute.xlu0 %350
    %v352 = vlaneseq
    %v353 = vshrl.u32 %v352, 7
    %v354 = vsub.s32 %v311, %v353
    %v355 = vrot.slane %v348, %v354
    %v356 = vlaneseq
    %v357 = vshrl.u32 %v356, 7
    %v358 = vsub.s32 %v311, %v357
    %v359 = vrot.slane %v351, %v358
    %v360 = vsel %vm320, %v359, %v355
    %v362 = vsel %vm323, %v360, 0.0
    %363 = vadd.xlane.f32.xlu0 %v362
    %v364 = vpop.xlane.xlu0 %363
    %v365 = vrcp.pop %v364
    %v367 = vlaneseq
    %v368 = vshrl.u32 %v367, 7
    %v369 = vsub.s32 0, %v368
    %v370 = vrot.slane %v365, %v369
    %v371 = vlaneseq
    %v372 = vshrl.u32 %v371, 7
    %v373 = vsub.s32 1, %v372
    %v374 = vrot.slane %v365, %v373
    %v377 = vmul.f32 %v341, %v370
    %v378 = vmul.f32 %v343, %v374
    %381 = vset.pattern.permute.xlu0 0
    %382 = vperm.xlu0 %381, %v377
    %v383 = vpop.permute.xlu0 %382
    %384 = vset.pattern.permute.xlu0 0
    %385 = vperm.xlu0 %384, %v378
    %v386 = vpop.permute.xlu0 %385
    %v387 = vlaneseq
    %v388 = vshrl.u32 %v387, 7
    %v389 = vsub.s32 %v311, %v388
    %v390 = vrot.slane %v383, %v389
    %v391 = vlaneseq
    %v392 = vshrl.u32 %v391, 7
    %v393 = vsub.s32 %v311, %v392
    %v394 = vrot.slane %v386, %v393
    %v395 = vsel %vm320, %v394, %v390
    %397 = vst.msk [vmem:[#allocation9] sm:$0x3] %vm323, %v395
    // Predicated region
    $region46: #{tpu_custom_call.1} parent=1 // pred_check
      _
    $region47: #{tpu_custom_call.1} parent=1 // pred_check_branch
      %399 = sbr.rel (0) target = $region49
    $region48: #{tpu_custom_call.1} parent=1 // pred_region
      %s401 = ssub.s32 32, 32
      %402 = vsyncadd [#allocation5], %s401
      %s404 = sshll.u32 [#allocation9], 4
      %s405 = int_to_ptr.vmem [resolvable:$true] %s404
      %407 = dma.vmem_to_hbm [thread:$0]  %s405, 32, %s8, [#allocation5]
    $region49: #{tpu_custom_call.1} parent=1 // pred_fallthru
      _
    // Predicated region
    $region50: #{tpu_custom_call.1} parent=1 // pred_check
      _
    $region51: #{tpu_custom_call.1} parent=1 // pred_check_branch
      %409 = sbr.rel (0) target = $region53
    $region52: #{tpu_custom_call.1} parent=1 // pred_region
      %410 = dma.done [#allocation5], 32
    $region53: #{tpu_custom_call.1} parent=1 // pred_fallthru
      _
    %411 = vsyncpa [#allocation4], 1
    %412 = vsyncpa [#allocation7], 1
    %413 = vsyncpa [#allocation5], 1

</llo_original>
